<compile_context>
chip_gen: v5e
topology: v5e:2x2
jax: 0.10.0
libtpu: 0.0.40
codegen_flags: <defaults>
</compile_context>

<pallas_src>
import functools

import jax
import jax.numpy as jnp
from jax import lax
from jax.experimental import pallas as pl
from jax.experimental.pallas import tpu as pltpu

IN_CH = 3
OUT_CH = 64
KH = KW = 7
K_DIM = KH * KW * IN_CH          # 147
CONV_STRIDE = 2
CONV_PAD = 3
POOL_K = 3
POOL_STRIDE = 2
POOL_PAD = 1
BN_EPS = 1e-5


def _stem_kernel(xcol_ref, xhalo_ref, w_ref, scale_ref, bias_ref, out_ref, ypad_ref,
                 *, tc, wo, cout):
    """One (batch, conv-row-block) tile: matmul conv + folded BN + ReLU + 3x3/s2 maxpool."""
    tp = tc // 2                  # pooled rows produced by this tile
    wp = wo // 2                  # pooled cols
    t = pl.program_id(1)

    w = w_ref[...]                # (K, Cout) bf16, resident across the grid
    scale = scale_ref[...]        # (1, Cout) f32
    bias = bias_ref[...]          # (1, Cout) f32

    # ---- conv rows of this tile: im2col matmul (bf16 in, f32 acc) + folded BN + ReLU ----
    xm = xcol_ref[...].reshape(tc * wo, K_DIM)                    # bf16
    ym = jnp.dot(xm, w, preferred_element_type=jnp.float32)       # (tc*wo, Cout) f32
    ym = jnp.maximum(ym * scale + bias, 0.0)

    # ---- one extra conv row directly above the tile (pooling halo).  For the first
    #      tile it is the zero pooling pad (zero is exact because y >= 0 after ReLU).
    xh = xhalo_ref[...].reshape(wo, K_DIM)
    yh = jnp.dot(xh, w, preferred_element_type=jnp.float32)       # (wo, Cout)
    yh = jnp.maximum(yh * scale + bias, 0.0)
    yh = jnp.where(t == 0, 0.0, yh)

    # ---- stage the tc+1 conv rows in a W-padded scratch (col 0 = left pooling pad) ----
    ypad_ref[:, pl.ds(0, 1), :] = jnp.zeros((tc + 1, 1, cout), jnp.float32)
    ypad_ref[pl.ds(0, 1), pl.ds(1, wo), :] = yh.reshape(1, wo, cout)
    ypad_ref[pl.ds(1, tc), pl.ds(1, wo), :] = ym.reshape(tc, wo, cout)

    # ---- 3x3 / stride-2 maxpool, vectorized ----
    # W direction: 3 sublane-strided slices of the padded scratch.
    c0 = ypad_ref[:, pl.ds(0, wp, stride=POOL_STRIDE), :]         # conv col 2j-1 (pad at j=0)
    c1 = ypad_ref[:, pl.ds(1, wp, stride=POOL_STRIDE), :]         # conv col 2j
    c2 = ypad_ref[:, pl.ds(2, wp, stride=POOL_STRIDE), :]         # conv col 2j+1
    cp = jnp.maximum(jnp.maximum(c0, c1), c2)                     # (tc+1, wp, Cout)

    # H direction: pooled local row i needs scratch rows 2i, 2i+1, 2i+2.
    cpa = cp[:tc].reshape(tp, 2, wp, cout)                        # leading-dim split (free)
    r0 = cpa[:, 0]
    r1 = cpa[:, 1]
    if tp > 1:
        r2 = jnp.concatenate([r0[1:], cp[tc:tc + 1]], axis=0)
    else:
        r2 = cp[tc:tc + 1]
    pooled = jnp.maximum(jnp.maximum(r0, r1), r2)                 # (tp, wp, Cout)

    out_ref[...] = pooled.reshape(1, 1, tp, wp, cout)


def _pick_conv_row_tile(ho, wo):
    """Even divisor of `ho` (conv rows per grid step).  Keep the bf16 im2col tile small
    enough to double-buffer comfortably in VMEM (also within v7x's 64 MiB), and prefer
    at least two spatial tiles per image so input DMA overlaps the matmul."""
    bytes_per_conv_row = wo * K_DIM * 2               # bf16
    budget = 2 * 1024 * 1024                          # per main im2col tile
    cands = [d for d in range(2, ho + 1, 2)
             if ho % d == 0 and d * bytes_per_conv_row <= budget]
    if not cands:
        return 2
    tc = max(cands)
    if tc == ho and len(cands) > 1:                   # keep >= 2 spatial tiles per image
        tc = sorted(cands)[-2]
    return tc


def basic_stem_forward(x_nchw, weight_hwio, bn_gamma, bn_beta, bn_mean, bn_var):
    n, cin, h, w = x_nchw.shape
    assert cin == IN_CH
    cout = weight_hwio.shape[-1]
    # TODO(synk): H/W that are not multiples of 4 (odd conv/pool output sizes) would need
    # a ragged final pooling window; the vectorized pooling assumes even output sizes.
    assert h % 4 == 0 and w % 4 == 0, "kernel assumes even conv/pool output sizes"
    ho, wo = h // 2, w // 2
    hp, wp = ho // 2, wo // 2

    # ---- wrapper glue: NCHW -> NHWC, pad, im2col (strided slices, no compute) ----
    x_nhwc = jnp.transpose(x_nchw, (0, 2, 3, 1)).astype(jnp.float32)
    x_pad = jnp.pad(x_nhwc, ((0, 0), (CONV_PAD, CONV_PAD), (CONV_PAD, CONV_PAD), (0, 0)))
    patches = [
        x_pad[:, kh:kh + CONV_STRIDE * ho:CONV_STRIDE,
              kw:kw + CONV_STRIDE * wo:CONV_STRIDE, :]
        for kh in range(KH) for kw in range(KW)
    ]
    # (N, ho, wo, KH*KW*Cin); flatten order (kh, kw, cin) matches the weight reshape.
    x_col = jnp.concatenate(patches, axis=-1).astype(jnp.bfloat16)
    # TODO(synk): im2col is still materialized in HBM (bf16, ~6x raw-input bytes); fusing
    # patch extraction in-kernel would need a gather over a 3-channel input and is left out.

    w2d = weight_hwio.reshape(K_DIM, cout).astype(jnp.bfloat16)
    scale_1d = (bn_gamma / jnp.sqrt(bn_var + BN_EPS)).astype(jnp.float32)
    bias_1d = (bn_beta - bn_mean * scale_1d).astype(jnp.float32)
    scale = scale_1d.reshape(1, cout)
    bias = bias_1d.reshape(1, cout)

    tc = _pick_conv_row_tile(ho, wo)   # conv rows per grid step (even, divides ho)
    tp = tc // 2
    n_tiles = ho // tc

    kernel = functools.partial(_stem_kernel, tc=tc, wo=wo, cout=cout)
    out = pl.pallas_call(
        kernel,
        out_shape=jax.ShapeDtypeStruct((n, n_tiles, tp, wp, cout), jnp.float32),
        grid=(n, n_tiles),
        in_specs=[
            # main block: tc conv rows worth of im2col patches
            pl.BlockSpec((1, tc, wo, K_DIM), lambda b, t: (b, t, 0, 0)),
            # halo block: the single conv row above the tile (clamped; zeroed when t == 0)
            pl.BlockSpec((1, 1, wo, K_DIM),
                         lambda b, t: (b, jnp.maximum(t * tc - 1, 0), 0, 0)),
            pl.BlockSpec((K_DIM, cout), lambda b, t: (0, 0)),
            pl.BlockSpec((1, cout), lambda b, t: (0, 0)),
            pl.BlockSpec((1, cout), lambda b, t: (0, 0)),
        ],
        out_specs=pl.BlockSpec((1, 1, tp, wp, cout), lambda b, t: (b, t, 0, 0, 0)),
        scratch_shapes=[pltpu.VMEM((tc + 1, wo + 1, cout), jnp.float32)],
        compiler_params=pltpu.CompilerParams(
            dimension_semantics=("parallel", "parallel"),
            vmem_limit_bytes=32 * 1024 * 1024),
    )(x_col, x_col, w2d, scale, bias)

    out_nhwc = out.reshape(n, hp, wp, cout)
    return jnp.transpose(out_nhwc, (0, 3, 1, 2))     # back to PyTorch NCHW


def reference_forward(x_nchw, weight_hwio, bn_gamma, bn_beta, bn_mean, bn_var):
    scale = bn_gamma / jnp.sqrt(bn_var + BN_EPS)
    bias = bn_beta - bn_mean * scale
    y = lax.conv_general_dilated(
        x_nchw.astype(jnp.float32), weight_hwio.astype(jnp.float32),
        window_strides=(CONV_STRIDE, CONV_STRIDE),
        padding=((CONV_PAD, CONV_PAD), (CONV_PAD, CONV_PAD)),
        dimension_numbers=("NCHW", "HWIO", "NCHW"),
        precision=lax.Precision.HIGHEST)
    y = y * scale[None, :, None, None] + bias[None, :, None, None]
    y = jnp.maximum(y, 0.0)
    y = lax.reduce_window(
        y, -jnp.inf, lax.max,
        (1, 1, POOL_K, POOL_K), (1, 1, POOL_STRIDE, POOL_STRIDE),
        ((0, 0), (0, 0), (POOL_PAD, POOL_PAD), (POOL_PAD, POOL_PAD)))
    return y


if __name__ == "__main__":
    key = jax.random.PRNGKey(0)
    kx, kw, kg, kb, km, kv = jax.random.split(key, 6)

    # small deterministic example input (NCHW, like PyTorch)
    x = jax.random.normal(kx, (2, IN_CH, 16, 16), dtype=jnp.float32)

    # deterministic parameters (c2_msra_fill ~ kaiming normal, BN eval-mode stats)
    fan_in = KH * KW * IN_CH
    weight = jax.random.normal(kw, (KH, KW, IN_CH, OUT_CH), dtype=jnp.float32) \
        * jnp.sqrt(2.0 / fan_in)
    bn_gamma = 1.0 + 0.1 * jax.random.normal(kg, (OUT_CH,), dtype=jnp.float32)
    bn_beta = 0.1 * jax.random.normal(kb, (OUT_CH,), dtype=jnp.float32)
    bn_mean = 0.1 * jax.random.normal(km, (OUT_CH,), dtype=jnp.float32)
    bn_var = 1.0 + 0.1 * jnp.abs(jax.random.normal(kv, (OUT_CH,), dtype=jnp.float32))

    out = basic_stem_forward(x, weight, bn_gamma, bn_beta, bn_mean, bn_var)
    out = jax.block_until_ready(out)

    assert out.shape == (2, OUT_CH, 4, 4), out.shape  # overall stride 4

    ref = reference_forward(x, weight, bn_gamma, bn_beta, bn_mean, bn_var)
    max_diff = float(jnp.max(jnp.abs(out - ref)))
    # bf16 matmul inputs vs an f32 HIGHEST-precision reference: allow bf16-level slack.
    if max_diff > 5e-2:
        raise AssertionError(f"mismatch vs reference, max abs diff = {max_diff}")

    print("KERNEL_OK")
</pallas_src>

<mosaic_0001>
module attributes {stable_mosaic.version = 11 : i64} {
  func.func @_stem_kernel(%arg0: i32, %arg1: i32, %arg2: memref<1x4x8x147xbf16, #tpu.memory_space<vmem>>, %arg3: memref<1x1x8x147xbf16, #tpu.memory_space<vmem>>, %arg4: memref<147x64xbf16, #tpu.memory_space<vmem>>, %arg5: memref<1x64xf32, #tpu.memory_space<vmem>>, %arg6: memref<1x64xf32, #tpu.memory_space<vmem>>, %arg7: memref<1x1x2x4x64xf32, #tpu.memory_space<vmem>>, %arg8: memref<5x9x64xf32, #tpu.memory_space<vmem>>) attributes {dimension_semantics = [#tpu.dimension_semantics<parallel>, #tpu.dimension_semantics<parallel>], iteration_bounds = array<i64: 2, 2>, scalar_prefetch = 0 : i64, scratch_operands = 1 : i64, tpu.core_type = #tpu.core_type<tc>, window_params = [{transform_indices = @transform_0, window_bounds = array<i64: 1, 4, 8, 147>}, {transform_indices = @transform_1, window_bounds = array<i64: 1, 1, 8, 147>}, {pipeline_mode = #tpu.pipeline_mode<synchronous>, transform_indices = @transform_2, window_bounds = array<i64: 147, 64>}, {pipeline_mode = #tpu.pipeline_mode<synchronous>, transform_indices = @transform_3, window_bounds = array<i64: 1, 64>}, {pipeline_mode = #tpu.pipeline_mode<synchronous>, transform_indices = @transform_4, window_bounds = array<i64: 1, 64>}, {transform_indices = @transform_5, window_bounds = array<i64: 1, 1, 2, 4, 64>}]} {
    %c0 = arith.constant 0 : index
    %c0_0 = arith.constant 0 : index
    %0 = vector.load %arg4[%c0, %c0_0] : memref<147x64xbf16, #tpu.memory_space<vmem>>, vector<147x64xbf16>
    %c0_1 = arith.constant 0 : index
    %c0_2 = arith.constant 0 : index
    %1 = vector.load %arg5[%c0_1, %c0_2] : memref<1x64xf32, #tpu.memory_space<vmem>>, vector<1x64xf32>
    %c0_3 = arith.constant 0 : index
    %c0_4 = arith.constant 0 : index
    %2 = vector.load %arg6[%c0_3, %c0_4] : memref<1x64xf32, #tpu.memory_space<vmem>>, vector<1x64xf32>
    %c0_5 = arith.constant 0 : index
    %c0_6 = arith.constant 0 : index
    %c0_7 = arith.constant 0 : index
    %c0_8 = arith.constant 0 : index
    %3 = vector.load %arg2[%c0_5, %c0_6, %c0_7, %c0_8] : memref<1x4x8x147xbf16, #tpu.memory_space<vmem>>, vector<1x4x8x147xbf16>
    %4 = vector.shape_cast %3 : vector<1x4x8x147xbf16> to vector<32x147xbf16>
    %cst = arith.constant dense<0.000000e+00> : vector<32x64xf32>
    %5 = tpu.matmul %4, %0, %cst {dimension_numbers = #tpu.dot_dimension_numbers<[1], [0], [0], [1], [0, 0, 1, 1], [], []>} : vector<32x147xbf16>, vector<147x64xbf16>, vector<32x64xf32> -> vector<32x64xf32>
    %6 = vector.broadcast %1 : vector<1x64xf32> to vector<32x64xf32>
    %7 = arith.mulf %5, %6 : vector<32x64xf32>
    %8 = vector.broadcast %2 : vector<1x64xf32> to vector<32x64xf32>
    %9 = arith.addf %7, %8 : vector<32x64xf32>
    %cst_9 = arith.constant 0.000000e+00 : f32
    %10 = vector.broadcast %cst_9 : f32 to vector<32x64xf32>
    %11 = arith.maximumf %9, %10 : vector<32x64xf32>
    %c0_10 = arith.constant 0 : index
    %c0_11 = arith.constant 0 : index
    %c0_12 = arith.constant 0 : index
    %c0_13 = arith.constant 0 : index
    %12 = vector.load %arg3[%c0_10, %c0_11, %c0_12, %c0_13] : memref<1x1x8x147xbf16, #tpu.memory_space<vmem>>, vector<1x1x8x147xbf16>
    %13 = vector.shape_cast %12 : vector<1x1x8x147xbf16> to vector<8x147xbf16>
    %cst_14 = arith.constant dense<0.000000e+00> : vector<8x64xf32>
    %14 = tpu.matmul %13, %0, %cst_14 {dimension_numbers = #tpu.dot_dimension_numbers<[1], [0], [0], [1], [0, 0, 1, 1], [], []>} : vector<8x147xbf16>, vector<147x64xbf16>, vector<8x64xf32> -> vector<8x64xf32>
    %15 = vector.broadcast %1 : vector<1x64xf32> to vector<8x64xf32>
    %16 = arith.mulf %14, %15 : vector<8x64xf32>
    %17 = vector.broadcast %2 : vector<1x64xf32> to vector<8x64xf32>
    %18 = arith.addf %16, %17 : vector<8x64xf32>
    %cst_15 = arith.constant 0.000000e+00 : f32
    %19 = vector.broadcast %cst_15 : f32 to vector<8x64xf32>
    %20 = arith.maximumf %18, %19 : vector<8x64xf32>
    %c0_i32 = arith.constant 0 : i32
    %21 = arith.cmpi eq, %arg1, %c0_i32 : i32
    %cst_16 = arith.constant 0.000000e+00 : f32
    %22 = vector.broadcast %cst_16 : f32 to vector<8x64xf32>
    %23 = arith.select %21, %22, %20 : vector<8x64xf32>
    %cst_17 = arith.constant 0.000000e+00 : f32
    %24 = vector.broadcast %cst_17 : f32 to vector<5x1x64xf32>
    %c0_18 = arith.constant 0 : index
    %c0_19 = arith.constant 0 : index
    %c0_20 = arith.constant 0 : index
    %25 = vector.load %arg8[%c0_18, %c0_19, %c0_20] : memref<5x9x64xf32, #tpu.memory_space<vmem>>, vector<5x1x64xf32>
    tpu.vector_store %arg8[%c0_18, %c0_19, %c0_20], %24 {strides = array<i32>} : memref<5x9x64xf32, #tpu.memory_space<vmem>>, vector<5x1x64xf32>,
    %26 = vector.shape_cast %23 : vector<8x64xf32> to vector<1x8x64xf32>
    %c0_21 = arith.constant 0 : index
    %c1 = arith.constant 1 : index
    %c0_22 = arith.constant 0 : index
    %27 = vector.load %arg8[%c0_21, %c1, %c0_22] : memref<5x9x64xf32, #tpu.memory_space<vmem>>, vector<1x8x64xf32>
    tpu.vector_store %arg8[%c0_21, %c1, %c0_22], %26 {strides = array<i32>} : memref<5x9x64xf32, #tpu.memory_space<vmem>>, vector<1x8x64xf32>,
    %28 = vector.shape_cast %11 : vector<32x64xf32> to vector<4x8x64xf32>
    %c1_23 = arith.constant 1 : index
    %c1_24 = arith.constant 1 : index
    %c0_25 = arith.constant 0 : index
    %29 = vector.load %arg8[%c1_23, %c1_24, %c0_25] : memref<5x9x64xf32, #tpu.memory_space<vmem>>, vector<4x8x64xf32>
    tpu.vector_store %arg8[%c1_23, %c1_24, %c0_25], %28 {strides = array<i32>} : memref<5x9x64xf32, #tpu.memory_space<vmem>>, vector<4x8x64xf32>,
    %c0_26 = arith.constant 0 : index
    %c0_27 = arith.constant 0 : index
    %c0_28 = arith.constant 0 : index
    %30 = tpu.strided_load %arg8[%c0_26, %c0_27, %c0_28] {strides = array<i32: 1, 2, 1>} : memref<5x9x64xf32, #tpu.memory_space<vmem>>, vector<5x4x64xf32>
    %c0_29 = arith.constant 0 : index
    %c1_30 = arith.constant 1 : index
    %c0_31 = arith.constant 0 : index
    %31 = tpu.strided_load %arg8[%c0_29, %c1_30, %c0_31] {strides = array<i32: 1, 2, 1>} : memref<5x9x64xf32, #tpu.memory_space<vmem>>, vector<5x4x64xf32>
    %c0_32 = arith.constant 0 : index
    %c2 = arith.constant 2 : index
    %c0_33 = arith.constant 0 : index
    %32 = tpu.strided_load %arg8[%c0_32, %c2, %c0_33] {strides = array<i32: 1, 2, 1>} : memref<5x9x64xf32, #tpu.memory_space<vmem>>, vector<5x4x64xf32>
    %33 = arith.maximumf %30, %31 : vector<5x4x64xf32>
    %34 = arith.maximumf %33, %32 : vector<5x4x64xf32>
    %35 = vector.extract_strided_slice %34 {offsets = [0, 0, 0], sizes = [4, 4, 64], strides = [1, 1, 1]} : vector<5x4x64xf32> to vector<4x4x64xf32>
    %36 = vector.shape_cast %35 : vector<4x4x64xf32> to vector<2x2x4x64xf32>
    %37 = vector.extract_strided_slice %36 {offsets = [0, 0, 0, 0], sizes = [2, 1, 4, 64], strides = [1, 1, 1, 1]} : vector<2x2x4x64xf32> to vector<2x1x4x64xf32>
    %38 = vector.shape_cast %37 : vector<2x1x4x64xf32> to vector<2x4x64xf32>
    %39 = vector.extract_strided_slice %36 {offsets = [0, 1, 0, 0], sizes = [2, 1, 4, 64], strides = [1, 1, 1, 1]} : vector<2x2x4x64xf32> to vector<2x1x4x64xf32>
    %40 = vector.shape_cast %39 : vector<2x1x4x64xf32> to vector<2x4x64xf32>
    %41 = vector.extract_strided_slice %38 {offsets = [1, 0, 0], sizes = [1, 4, 64], strides = [1, 1, 1]} : vector<2x4x64xf32> to vector<1x4x64xf32>
    %42 = vector.extract_strided_slice %34 {offsets = [4, 0, 0], sizes = [1, 4, 64], strides = [1, 1, 1]} : vector<5x4x64xf32> to vector<1x4x64xf32>
    %43 = tpu.concatenate %41, %42 in 0 : vector<1x4x64xf32>, vector<1x4x64xf32> -> vector<2x4x64xf32>
    %44 = arith.maximumf %38, %40 : vector<2x4x64xf32>
    %45 = arith.maximumf %44, %43 : vector<2x4x64xf32>
    %46 = vector.shape_cast %45 : vector<2x4x64xf32> to vector<1x1x2x4x64xf32>
    %c0_34 = arith.constant 0 : index
    %c0_35 = arith.constant 0 : index
    %c0_36 = arith.constant 0 : index
    %c0_37 = arith.constant 0 : index
    %c0_38 = arith.constant 0 : index
    %47 = vector.load %arg7[%c0_34, %c0_35, %c0_36, %c0_37, %c0_38] : memref<1x1x2x4x64xf32, #tpu.memory_space<vmem>>, vector<1x1x2x4x64xf32>
    tpu.vector_store %arg7[%c0_34, %c0_35, %c0_36, %c0_37, %c0_38], %46 {strides = array<i32>} : memref<1x1x2x4x64xf32, #tpu.memory_space<vmem>>, vector<1x1x2x4x64xf32>,
    return
  }
  func.func @transform_0(%arg0: i32, %arg1: i32) -> (i32, i32, i32, i32) {
    %c0_i32 = arith.constant 0 : i32
    %c0_i32_0 = arith.constant 0 : i32
    %c0_i32_1 = arith.constant 0 : i32
    return %arg0, %arg1, %c0_i32, %c0_i32_0 : i32, i32, i32, i32
  }
  func.func @transform_1(%arg0: i32, %arg1: i32) -> (i32, i32, i32, i32) {
    %c4_i32 = arith.constant 4 : i32
    %0 = arith.muli %arg1, %c4_i32 : i32
    %c1_i32 = arith.constant 1 : i32
    %1 = arith.subi %0, %c1_i32 : i32
    %c0_i32 = arith.constant 0 : i32
    %2 = arith.maxsi %1, %c0_i32 : i32
    %c0_i32_0 = arith.constant 0 : i32
    %c0_i32_1 = arith.constant 0 : i32
    %c0_i32_2 = arith.constant 0 : i32
    return %arg0, %2, %c0_i32_0, %c0_i32_1 : i32, i32, i32, i32
  }
  func.func @transform_2(%arg0: i32, %arg1: i32) -> (i32, i32) {
    %c0_i32 = arith.constant 0 : i32
    %c0_i32_0 = arith.constant 0 : i32
    %c0_i32_1 = arith.constant 0 : i32
    return %c0_i32, %c0_i32_0 : i32, i32
  }
  func.func @transform_3(%arg0: i32, %arg1: i32) -> (i32, i32) {
    %c0_i32 = arith.constant 0 : i32
    %c0_i32_0 = arith.constant 0 : i32
    %c0_i32_1 = arith.constant 0 : i32
    return %c0_i32, %c0_i32_0 : i32, i32
  }
  func.func @transform_4(%arg0: i32, %arg1: i32) -> (i32, i32) {
    %c0_i32 = arith.constant 0 : i32
    %c0_i32_0 = arith.constant 0 : i32
    %c0_i32_1 = arith.constant 0 : i32
    return %c0_i32, %c0_i32_0 : i32, i32
  }
  func.func @transform_5(%arg0: i32, %arg1: i32) -> (i32, i32, i32, i32, i32) {
    %c0_i32 = arith.constant 0 : i32
    %c0_i32_0 = arith.constant 0 : i32
    %c0_i32_1 = arith.constant 0 : i32
    %c0_i32_2 = arith.constant 0 : i32
    return %arg0, %arg1, %c0_i32, %c0_i32_0, %c0_i32_1 : i32, i32, i32, i32, i32
  }
}

</mosaic_0001>

<llo_original>
// kernel: tpu_custom_call.1
$region0: #{tpu_custom_call.1}
  #allocation0 [shape = 'u32[]', space=smem, size = 0x4, offset = 0x4, fixed_abs, tag = 'smem constant byte address 0x4 - core index']
  #allocation1 [shape = 'u32[72,128]{1,0:T(1,128)}', space=vmem, size = 0x9000, scoped, tag = 'internal scratch']
  #allocation2 [shape = 'f32[5,9,64]{2,1,0:T(8,128)}', space=vmem, size = 0xa000, scoped, tag = 'scratch operand']
  %s0 = inlined_call_operand.vmem [shape: bf16[2,8,8,147], index: 0, kind: input, shape index: {}]
  %s1 = inlined_call_operand.hbm [shape: bf16[2,8,8,147], index: 1, kind: input, shape index: {}]
  %s2 = inlined_call_operand.vmem [shape: bf16[147,64], index: 2, kind: input, shape index: {}]
  %s3 = inlined_call_operand.vmem [shape: f32[1,64], index: 3, kind: input, shape index: {}]
  %s4 = inlined_call_operand.vmem [shape: f32[1,64], index: 4, kind: input, shape index: {}]
  %s5 = inlined_call_operand.hbm [shape: f32[2,2,2,4,64], index: 5, kind: output, shape index: {}]
  %s6 = sld [smem:[#allocation0]]
  $region57: #{tpu_custom_call.1} parent=0
    _
  %s8 = ssub.s32 1, %s6
  %s9 = scalar_select 0, %s8, %s6
  $region1: #{tpu_custom_call.1} parent=0
    #allocation3 [shape = 'u8[8192]{0}', space=vmem, size = 0x2000, scoped, tag = 'input window, operand 1']
    #allocation4 [shape = 's32[2]{0}', space=sflag, size = 0x8, scoped, tag = 'scoped memory for tpu_custom_call.1']
    #allocation5 [shape = 's32[2]{0}', space=sflag, size = 0x8, scoped, tag = 'scoped memory for tpu_custom_call.1']
    #allocation6 [shape = 'u8[8192]{0}', space=vmem, size = 0x2000, scoped, tag = 'output window, operand 0']
    %10 = vsyncpa [#allocation4], 0
    %s11 = scalar_lea.sflag [#allocation4], 1
    %12 = vsyncpa %s11, 0
    %13 = vsyncpa [#allocation5], 0
    %s14 = scalar_lea.sflag [#allocation5], 1
    %15 = vsyncpa %s14, 0
    loop: start=0, step=1, limit=6
    $region2: #{tpu_custom_call.1} parent=1 // loop_pre_header
      _
    $region3: #{tpu_custom_call.1} parent=1 // loop_header
      %s17 = sphi 0, %s21
      %p18 = scmp.ge.s32.totalorder %s17, 6
      %s24 = sphi 0, %s36
      %s25 = sphi 0, %s32
      %s26 = sphi 0, %s24
      %s27 = sphi 0, %s25
      %s28 = sphi 0, %s26
      %s29 = sphi 0, %s27
      %s41 = sphi 0, %s43
      %s44 = sphi 0, %s41
      %s45 = sphi 0, %s44
      %s61 = sphi 0, %s45
      %s77 = sphi 0, %s79
      %s80 = sphi 0, %s77
      %s81 = sphi 0, %s80
      %s97 = sphi 0, %s81
      %s101 = sphi 0, %s101
      %s103 = sphi 0, %s101
      %s104 = sphi 0, %s103
      %s118 = sphi 0, %s104
      %s122 = sphi 0, %s122
      %s124 = sphi 0, %s122
      %s125 = sphi 0, %s124
      %s139 = sphi 0, %s125
      %s143 = sphi 0, %s143
      %s145 = sphi 0, %s143
      %s146 = sphi 0, %s145
      %s160 = sphi 0, %s146
      %s168 = sphi 0, %s170
      %s171 = sphi 0, %s168
      %s172 = sphi 0, %s171
      %s188 = sphi 0, %s172
    $region4: #{tpu_custom_call.1} parent=1 // loop_header_branch
      %20 = sbr.rel (%p18) target = $region8
    $region5: #{tpu_custom_call.1} parent=1 // loop_body
      %s22 = ssub.s32 %s17, 1
      %s23 = ssub.s32 %s17, 2
      %s30 = sadd.s32 1, %s25
      %p31 = scmp.ge.s32.totalorder %s30, 2
      %s32 = scalar_select %p31, 0, %s30
      %s33 = sadd.s32 1, %s24
      %s34 = scalar_select %p31, %s33, %s24
      %p35 = scmp.ge.s32.totalorder %s34, 2
      %s36 = scalar_select %p35, 0, %s34
      %s37 = ssub.s32 %s24, %s36
      %s38 = ssub.s32 %s25, %s32
      %s39 = sor.u32 %s37, %s38
      %p40 = scmp.eq.s32.totalorder %s39, 0
      %s42 = sadd.s32 %s41, 1
      %s43 = scalar_select %p40, %s41, %s42
      %p46 = pneg %p40
      %p47 = scmp.eq.s32.totalorder %s17, 3
      %p48 = por %p46, %p47
      %p49 = scmp.ne.s32.totalorder %s41, %s44
      %p50 = scmp.eq.s32.totalorder %s17, 0
      %p51 = por %p49, %p50
      %p52 = scmp.ne.s32.totalorder %s41, %s44
      %p53 = scmp.eq.s32.totalorder %s22, 3
      %p54 = por %p52, %p53
      %p55 = scmp.ne.s32.totalorder %s44, %s45
      %p56 = scmp.eq.s32.totalorder %s22, 0
      %p57 = por %p55, %p56
      %p58 = scmp.ne.s32.totalorder %s44, %s45
      %p59 = scmp.eq.s32.totalorder %s23, 3
      %p60 = por %p58, %p59
      %p62 = scmp.ne.s32.totalorder %s45, %s61
      %p63 = scmp.eq.s32.totalorder %s23, 0
      %p64 = por %p62, %p63
      %s65 = smul.u32 %s25, 4
      %s66 = ssub.s32 %s65, 1
      %p67 = scmp.gt.s32.totalorder %s66, 0
      %s68 = scalar_select %p67, %s66, 0
      %s69 = smul.u32 %s32, 4
      %s70 = ssub.s32 %s69, 1
      %p71 = scmp.gt.s32.totalorder %s70, 0
      %s72 = scalar_select %p71, %s70, 0
      %s73 = ssub.s32 %s24, %s36
      %s74 = ssub.s32 %s68, %s72
      %s75 = sor.u32 %s73, %s74
      %p76 = scmp.eq.s32.totalorder %s75, 0
      %s78 = sadd.s32 %s77, 1
      %s79 = scalar_select %p76, %s77, %s78
      %p82 = pneg %p76
      %p83 = scmp.eq.s32.totalorder %s17, 3
      %p84 = por %p82, %p83
      %p85 = scmp.ne.s32.totalorder %s77, %s80
      %p86 = scmp.eq.s32.totalorder %s17, 0
      %p87 = por %p85, %p86
      %p88 = scmp.ne.s32.totalorder %s77, %s80
      %p89 = scmp.eq.s32.totalorder %s22, 3
      %p90 = por %p88, %p89
      %p91 = scmp.ne.s32.totalorder %s80, %s81
      %p92 = scmp.eq.s32.totalorder %s22, 0
      %p93 = por %p91, %p92
      %p94 = scmp.ne.s32.totalorder %s80, %s81
      %p95 = scmp.eq.s32.totalorder %s23, 3
      %p96 = por %p94, %p95
      %p98 = scmp.ne.s32.totalorder %s81, %s97
      %p99 = scmp.eq.s32.totalorder %s23, 0
      %p100 = por %p98, %p99
      %s102 = sadd.s32 %s101, 1
      %p105 = scmp.eq.s32.totalorder %s17, 3
      %p106 = scmp.ne.s32.totalorder %s101, %s103
      %p107 = scmp.eq.s32.totalorder %s17, 0
      %p108 = por %p106, %p107
      %p109 = scmp.ne.s32.totalorder %s101, %s103
      %p110 = scmp.eq.s32.totalorder %s22, 3
      %p111 = por %p109, %p110
      %p112 = scmp.ne.s32.totalorder %s103, %s104
      %p113 = scmp.eq.s32.totalorder %s22, 0
      %p114 = por %p112, %p113
      %p115 = scmp.ne.s32.totalorder %s103, %s104
      %p116 = scmp.eq.s32.totalorder %s23, 3
      %p117 = por %p115, %p116
      %p119 = scmp.ne.s32.totalorder %s104, %s118
      %p120 = scmp.eq.s32.totalorder %s23, 0
      %p121 = por %p119, %p120
      %s123 = sadd.s32 %s122, 1
      %p126 = scmp.eq.s32.totalorder %s17, 3
      %p127 = scmp.ne.s32.totalorder %s122, %s124
      %p128 = scmp.eq.s32.totalorder %s17, 0
      %p129 = por %p127, %p128
      %p130 = scmp.ne.s32.totalorder %s122, %s124
      %p131 = scmp.eq.s32.totalorder %s22, 3
      %p132 = por %p130, %p131
      %p133 = scmp.ne.s32.totalorder %s124, %s125
      %p134 = scmp.eq.s32.totalorder %s22, 0
      %p135 = por %p133, %p134
      %p136 = scmp.ne.s32.totalorder %s124, %s125
      %p137 = scmp.eq.s32.totalorder %s23, 3
      %p138 = por %p136, %p137
      %p140 = scmp.ne.s32.totalorder %s125, %s139
      %p141 = scmp.eq.s32.totalorder %s23, 0
      %p142 = por %p140, %p141
      %s144 = sadd.s32 %s143, 1
      %p147 = scmp.eq.s32.totalorder %s17, 3
      %p148 = scmp.ne.s32.totalorder %s143, %s145
      %p149 = scmp.eq.s32.totalorder %s17, 0
      %p150 = por %p148, %p149
      %p151 = scmp.ne.s32.totalorder %s143, %s145
      %p152 = scmp.eq.s32.totalorder %s22, 3
      %p153 = por %p151, %p152
      %p154 = scmp.ne.s32.totalorder %s145, %s146
      %p155 = scmp.eq.s32.totalorder %s22, 0
      %p156 = por %p154, %p155
      %p157 = scmp.ne.s32.totalorder %s145, %s146
      %p158 = scmp.eq.s32.totalorder %s23, 3
      %p159 = por %p157, %p158
      %p161 = scmp.ne.s32.totalorder %s146, %s160
      %p162 = scmp.eq.s32.totalorder %s23, 0
      %p163 = por %p161, %p162
      %s164 = ssub.s32 %s24, %s36
      %s165 = ssub.s32 %s25, %s32
      %s166 = sor.u32 %s164, %s165
      %p167 = scmp.eq.s32.totalorder %s166, 0
      %s169 = sadd.s32 %s168, 1
      %s170 = scalar_select %p167, %s168, %s169
      %p173 = pneg %p167
      %p174 = scmp.eq.s32.totalorder %s17, 3
      %p175 = por %p173, %p174
      %p176 = scmp.ne.s32.totalorder %s168, %s171
      %p177 = scmp.eq.s32.totalorder %s17, 0
      %p178 = por %p176, %p177
      %p179 = scmp.ne.s32.totalorder %s168, %s171
      %p180 = scmp.eq.s32.totalorder %s22, 3
      %p181 = por %p179, %p180
      %p182 = scmp.ne.s32.totalorder %s171, %s172
      %p183 = scmp.eq.s32.totalorder %s22, 0
      %p184 = por %p182, %p183
      %p185 = scmp.ne.s32.totalorder %s171, %s172
      %p186 = scmp.eq.s32.totalorder %s23, 3
      %p187 = por %p185, %p186
      %p189 = scmp.ne.s32.totalorder %s172, %s188
      %p190 = scmp.eq.s32.totalorder %s23, 0
      %p191 = por %p189, %p190
      %p192 = scmp.le.s32.totalorder 1, %s17
      %p193 = scmp.lt.s32.totalorder %s17, 5
      %p194 = pnand %p192, %p193
      %p195 = pneg %p194
      // Predicated region
      $region9: #{tpu_custom_call.1} parent=5 // pred_check
        _
      $region10: #{tpu_custom_call.1} parent=5 // pred_check_branch
        %197 = sbr.rel (%p194) target = $region12
      $region11: #{tpu_custom_call.1} parent=5 // pred_region
        %s198 = ssub.s32 %s17, 1
        // Predicated region
        $region13: #{tpu_custom_call.1} parent=11 // pred_check
          %p199 = pneg %p114
        $region14: #{tpu_custom_call.1} parent=11 // pred_check_branch
          %201 = sbr.rel (%p199) target = $region16
        $region15: #{tpu_custom_call.1} parent=11 // pred_region
          _
        $region16: #{tpu_custom_call.1} parent=11 // pred_fallthru
          _
        // Predicated region
        $region17: #{tpu_custom_call.1} parent=11 // pred_check
          %p202 = pneg %p135
        $region18: #{tpu_custom_call.1} parent=11 // pred_check_branch
          %204 = sbr.rel (%p202) target = $region20
        $region19: #{tpu_custom_call.1} parent=11 // pred_region
          _
        $region20: #{tpu_custom_call.1} parent=11 // pred_fallthru
          _
        // Predicated region
        $region21: #{tpu_custom_call.1} parent=11 // pred_check
          %p205 = pneg %p156
        $region22: #{tpu_custom_call.1} parent=11 // pred_check_branch
          %207 = sbr.rel (%p205) target = $region24
        $region23: #{tpu_custom_call.1} parent=11 // pred_region
          _
        $region24: #{tpu_custom_call.1} parent=11 // pred_fallthru
          _
      $region12: #{tpu_custom_call.1} parent=5 // pred_fallthru
        _
      %p208 = scmp.lt.s32.totalorder %s17, 4
      // Predicated region
      $region25: #{tpu_custom_call.1} parent=5 // pred_check
        %p209 = pneg %p208
      $region26: #{tpu_custom_call.1} parent=5 // pred_check_branch
        %211 = sbr.rel (%p209) target = $region28
      $region27: #{tpu_custom_call.1} parent=5 // pred_region
        // Predicated region
        $region29: #{tpu_custom_call.1} parent=27 // pred_check
          %p212 = pneg %p51
        $region30: #{tpu_custom_call.1} parent=27 // pred_check_branch
          %214 = sbr.rel (%p212) target = $region32
        $region31: #{tpu_custom_call.1} parent=27 // pred_region
          %s215 = smul.u32 4, %s25
          %p216 = scmp.lt.s32.totalorder %s24, 1
          %s217 = scalar_select %p216, %s24, 1
          %p218 = scmp.lt.s32.totalorder %s215, 7
          %s219 = scalar_select %p218, %s215, 7
          %s220 = smul.addr %s219, 2
          %s221 = smul.addr %s217, 16
          %s222 = sadd.s32 %s220, %s221
          %s223 = smul.addr %s222, 4
          %s224 = scalar_lea.vmem %s0, %s223
          %s225 = smul.u32 4, %s25
        $region32: #{tpu_custom_call.1} parent=27 // pred_fallthru
          _
        // Predicated region
        $region33: #{tpu_custom_call.1} parent=27 // pred_check
          %p226 = pneg %p87
        $region34: #{tpu_custom_call.1} parent=27 // pred_check_branch
          %228 = sbr.rel (%p226) target = $region36
        $region35: #{tpu_custom_call.1} parent=27 // pred_region
          %s229 = sand.u32 %s77, 1
          %s230 = scalar_lea.sflag [#allocation4], %s229
          %s231 = sand.u32 %s77, 1
          %s232 = smul.addr %s231, 8
          %s233 = scalar_lea.vmem [#allocation3], %s232
          %s234 = smul.u32 %s25, 4
          %s235 = ssub.s32 %s234, 1
          %p236 = scmp.gt.s32.totalorder %s235, 0
          %s237 = scalar_select %p236, %s235, 0
          %239 = vsyncadd %s230, 0
          %s240 = smul.addr %s237, 2
          %s241 = smul.addr %s24, 16
          %s242 = sadd.s32 %s240, %s241
          %s243 = smul.addr %s242, 4
          %s244 = scalar_lea.hbm %s1, %s243
          %s246 = sshll.u32 %s244, 4
          %s247 = int_to_ptr.hbm [resolvable:$true] %s246
          %s248 = sshll.u32 %s233, 4
          %s249 = int_to_ptr.vmem [resolvable:$true] %s248
          %251 = dma.hbm_to_vmem [thread:$0]  %s247, 128, %s249, %s230
        $region36: #{tpu_custom_call.1} parent=27 // pred_fallthru
          _
      $region28: #{tpu_custom_call.1} parent=5 // pred_fallthru
        _
      %p252 = scmp.le.s32.totalorder 1, %s17
      %p253 = scmp.lt.s32.totalorder %s17, 5
      %p254 = pnand %p252, %p253
      %p255 = pneg %p254
      // Predicated region
      $region37: #{tpu_custom_call.1} parent=5 // pred_check
        _
      $region38: #{tpu_custom_call.1} parent=5 // pred_check_branch
        %257 = sbr.rel (%p254) target = $region40
      $region39: #{tpu_custom_call.1} parent=5 // pred_region
        %s258 = ssub.s32 %s17, 1
        %s259 = sand.u32 %s80, 1
        %s260 = scalar_lea.sflag [#allocation4], %s259
        %s261 = sand.u32 %s80, 1
        %s262 = smul.addr %s261, 8
        %s263 = scalar_lea.vmem [#allocation3], %s262
        // Predicated region
        $region41: #{tpu_custom_call.1} parent=39 // pred_check
          %p264 = pneg %p93
        $region42: #{tpu_custom_call.1} parent=39 // pred_check_branch
          %266 = sbr.rel (%p264) target = $region44
        $region43: #{tpu_custom_call.1} parent=39 // pred_region
          %268 = dma.done %s260, 128
        $region44: #{tpu_custom_call.1} parent=39 // pred_fallthru
          _
        %s269 = smul.u32 4, %s27
        %p270 = scmp.lt.s32.totalorder %s26, 1
        %s271 = scalar_select %p270, %s26, 1
        %p272 = scmp.lt.s32.totalorder %s269, 7
        %s273 = scalar_select %p272, %s269, 7
        %s274 = smul.addr %s273, 2
        %s275 = smul.addr %s271, 16
        %s276 = sadd.s32 %s274, %s275
        %s277 = smul.addr %s276, 4
        %s278 = scalar_lea.vmem %s0, %s277
        %p279 = pneg %p57
        %p280 = pneg %p54
        %s281 = sand.u32 %s80, 1
        %s282 = scalar_lea.sflag [#allocation4], %s281
        %s283 = sand.u32 %s80, 1
        %s284 = smul.addr %s283, 8
        %s285 = scalar_lea.vmem [#allocation3], %s284
        %p286 = pneg %p93
        %p287 = pneg %p90
        %p288 = pneg %p114
        %p289 = pneg %p111
        %p290 = pneg %p135
        %p291 = pneg %p132
        %p292 = pneg %p156
        %p293 = pneg %p153
        %p294 = pneg %p184
        %p295 = pneg %p181
        %s296 = sand.u32 %s171, 1
        %s297 = scalar_lea.sflag [#allocation5], %s296
        %s298 = sand.u32 %s171, 1
        %s299 = smul.addr %s298, 8
        %s300 = scalar_lea.vmem [#allocation6], %s299
        %s301 = smul.u32 4, %s27
        %p302 = scmp.lt.s32.totalorder %s26, 1
        %s303 = scalar_select %p302, %s26, 1
        %p304 = scmp.lt.s32.totalorder %s301, 7
        %s305 = scalar_select %p304, %s301, 7
        %s306 = smul.addr %s305, 2
        %s307 = smul.addr %s303, 16
        %s308 = sadd.s32 %s306, %s307
        %s309 = smul.addr %s308, 4
        %s310 = scalar_lea.vmem %s0, %s309
        %s311 = smul.u32 4, %s27
        %s312 = smul.u32 %s27, 4
        %s313 = ssub.s32 %s312, 1
        %p314 = scmp.gt.s32.totalorder %s313, 0
        %s315 = scalar_select %p314, %s313, 0
        %v317 = vld [vmem:[%s2] sm:$0xf]
        %v318 = vld [vmem:[%s2 + $0x4] sm:$0xf]
        %v319 = vld [vmem:[%s2 + $0x8] sm:$0xf]
        %v320 = vld [vmem:[%s2 + $0xc] sm:$0xf]
        %v321 = vld [vmem:[%s2 + $0x10] sm:$0xf]
        %v322 = vld [vmem:[%s2 + $0x14] sm:$0xf]
        %v323 = vld [vmem:[%s2 + $0x18] sm:$0xf]
        %v324 = vld [vmem:[%s2 + $0x1c] sm:$0xf]
        %v325 = vld [vmem:[%s2 + $0x20] sm:$0xf]
        %v326 = vld [vmem:[%s2 + $0x24] sm:$0xf]
        %v327 = vld [vmem:[%s2 + $0x28] sm:$0xf]
        %v328 = vld [vmem:[%s2 + $0x2c] sm:$0xf]
        %v329 = vld [vmem:[%s2 + $0x30] sm:$0xf]
        %v330 = vld [vmem:[%s2 + $0x34] sm:$0xf]
        %v331 = vld [vmem:[%s2 + $0x38] sm:$0xf]
        %v332 = vld [vmem:[%s2 + $0x3c] sm:$0xf]
        %v333 = vld [vmem:[%s2 + $0x40] sm:$0xf]
        %v334 = vld [vmem:[%s2 + $0x44] sm:$0xf]
        %v335 = vld [vmem:[%s2 + $0x48] sm:$0x3]
        %v336 = vld [vmem:[%s3] sm:$0x1]
        %v337 = vld [vmem:[%s4] sm:$0x1]
        %v338 = vld [vmem:[%s310] sm:$0xff]
        %v339 = vld [vmem:[%s310 + $0x8] sm:$0xff]
        %v340 = vld [vmem:[%s310 + $0x10] sm:$0xff]
        %v341 = vld [vmem:[%s310 + $0x18] sm:$0xff]
        %v346 = vunpack.c.l.b16 %v338
        %v347 = vunpack.c.h.b16 %v338
        %v348 = vunpack.c.l.b16 %v339
        %v349 = vunpack.c.h.b16 %v339
        %v350 = vunpack.c.l.b16 %v340
        %v351 = vunpack.c.h.b16 %v340
        %v352 = vunpack.c.l.b16 %v341
        %v353 = vunpack.c.h.b16 %v341
        %v354 = vpack.c.b16 %v348, %v346
        %v355 = vpack.c.b16 %v349, %v347
        %v356 = vpack.c.b16 %v352, %v350
        %v357 = vpack.c.b16 %v353, %v351
        %v379 = vunpack.c.l.b16 %v317
        %v380 = vunpack.c.l.b16 %v318
        %v381 = vunpack.c.l.b16 %v319
        %v382 = vunpack.c.l.b16 %v320
        %v383 = vunpack.c.l.b16 %v321
        %v384 = vunpack.c.l.b16 %v322
        %v385 = vunpack.c.l.b16 %v323
        %v386 = vunpack.c.l.b16 %v324
        %v387 = vunpack.c.l.b16 %v325
        %v388 = vunpack.c.l.b16 %v326
        %v389 = vunpack.c.l.b16 %v327
        %v390 = vunpack.c.l.b16 %v328
        %v391 = vunpack.c.l.b16 %v329
        %v392 = vunpack.c.l.b16 %v330
        %v393 = vunpack.c.l.b16 %v331
        %v394 = vunpack.c.l.b16 %v332
        %v395 = vunpack.c.l.b16 %v333
        %v396 = vunpack.c.l.b16 %v334
        %v397 = vunpack.c.l.b16 %v335
        %v398 = vpack.c.b16 %v380, %v379
        %v399 = vpack.c.b16 %v382, %v381
        %v400 = vpack.c.b16 %v384, %v383
        %v401 = vpack.c.b16 %v386, %v385
        %v402 = vpack.c.b16 %v388, %v387
        %v403 = vpack.c.b16 %v390, %v389
        %v404 = vpack.c.b16 %v392, %v391
        %v405 = vpack.c.b16 %v394, %v393
        %v406 = vpack.c.b16 %v396, %v395
        %v407 = vpack.c.b16 %v397, %v397
        %vm417 = vcmask 154624
        %v419 = vsel %vm417, %v355, 0
        %v422 = vsel %vm417, %v357, 0
        %vm424 = vcmask 1040384
        %vm425 = vcmask 1041408
        %v426 = vsel %vm424, 4294967295, 65535
        %v427 = vsel %vm425, %v426, 0
        %v429 = vand.u32 %v407, %v427
        %431 = vmatpush.bf16.msra.mxu0 %v405
        %432 = vmatpush.bf16.msra.mxu0 %v404
        %433 = vmatpush.bf16.msra.mxu0 %v403
        %434 = vmatpush.bf16.msra.mxu0 %v402
        %435 = vmatpush.bf16.msra.mxu0 %v401
        %436 = vmatpush.bf16.msra.mxu0 %v400
        %437 = vmatpush.bf16.msra.mxu0 %v399
        %438 = vmatpush.bf16.msra.mxu0 %v398
        %439 = vmatmul.bf16.gmra.mxu0 %v354
        %v440 = vpop.f32.mrf.mxu0
        %v441 = vadd.f32 0.0, %v440
        %v442 = vpop.f32.mrf.mxu0
        %v443 = vadd.f32 0.0, %v442
        %444 = vmatmul.bf16.gmra.mxu0 %v356
        %v445 = vpop.f32.mrf.mxu0
        %v446 = vadd.f32 0.0, %v445
        %v447 = vpop.f32.mrf.mxu0
        %v448 = vadd.f32 0.0, %v447
        %449 = vdwg.mxu0
        %450 = vmatpush.bf16.msra.mxu0 0
        %451 = vmatpush.bf16.msra.mxu0 0
        %452 = vmatpush.bf16.msra.mxu0 0
        %453 = vmatpush.bf16.msra.mxu0 0
        %454 = vmatpush.bf16.msra.mxu0 0
        %455 = vmatpush.bf16.msra.mxu0 0
        %456 = vmatpush.bf16.msra.mxu0 %v429
        %457 = vmatpush.bf16.msra.mxu0 %v406
        %458 = vmatmul.bf16.gmra.mxu0 %v419
        %v459 = vpop.f32.mrf.mxu0
        %v460 = vadd.f32 %v441, %v459
        %v461 = vpop.f32.mrf.mxu0
        %v462 = vadd.f32 %v443, %v461
        %463 = vmatmul.bf16.gmra.mxu0 %v422
        %v464 = vpop.f32.mrf.mxu0
        %v465 = vadd.f32 %v446, %v464
        %v466 = vpop.f32.mrf.mxu0
        %v467 = vadd.f32 %v448, %v466
        %468 = vdwg.mxu0
        %v470 = vperm.slane %v336, 0
        %v472 = vmul.f32 %v460, %v470
        %v473 = vmul.f32 %v462, %v470
        %v474 = vmul.f32 %v465, %v470
        %v475 = vmul.f32 %v467, %v470
        %v477 = vperm.slane %v337, 0
        %v479 = vadd.f32 %v472, %v477
        %v480 = vadd.f32 %v473, %v477
        %v481 = vadd.f32 %v474, %v477
        %v482 = vadd.f32 %v475, %v477
        %v483 = vmax.f32 %v479, 0.0
        %v484 = vmax.f32 %v480, 0.0
        %v485 = vmax.f32 %v481, 0.0
        %v486 = vmax.f32 %v482, 0.0
        %v487 = vld [vmem:[%s263] sm:$0xff]
        %v489 = vunpack.c.l.b16 %v487
        %v490 = vunpack.c.h.b16 %v487
        %v491 = vpack.c.b16 %v489, %v489
        %v492 = vpack.c.b16 %v490, %v490
        %v495 = vsel %vm417, %v492, 0
        %497 = vmatpush.bf16.msra.mxu0 %v405
        %498 = vmatpush.bf16.msra.mxu0 %v404
        %499 = vmatpush.bf16.msra.mxu0 %v403
        %500 = vmatpush.bf16.msra.mxu0 %v402
        %501 = vmatpush.bf16.msra.mxu0 %v401
        %502 = vmatpush.bf16.msra.mxu0 %v400
        %503 = vmatpush.bf16.msra.mxu0 %v399
        %504 = vmatpush.bf16.msra.mxu0 %v398
        %505 = vmatmul.bf16.gmra.mxu0 %v491
        %v506 = vpop.f32.mrf.mxu0
        %v507 = vadd.f32 0.0, %v506
        %v508 = vpop.f32.mrf.mxu0
        %509 = vdwg.mxu0
        %510 = vmatpush.bf16.msra.mxu0 0
        %511 = vmatpush.bf16.msra.mxu0 0
        %512 = vmatpush.bf16.msra.mxu0 0
        %513 = vmatpush.bf16.msra.mxu0 0
        %514 = vmatpush.bf16.msra.mxu0 0
        %515 = vmatpush.bf16.msra.mxu0 0
        %516 = vmatpush.bf16.msra.mxu0 %v429
        %517 = vmatpush.bf16.msra.mxu0 %v406
        %518 = vmatmul.bf16.gmra.mxu0 %v495
        %v519 = vpop.f32.mrf.mxu0
        %v520 = vadd.f32 %v507, %v519
        %v521 = vpop.f32.mrf.mxu0
        %522 = vdwg.mxu0
        %v523 = vmul.f32 %v520, %v470
        %v524 = vadd.f32 %v523, %v477
        %v525 = vmax.f32 %v524, 0.0
        %p526 = scmp.eq.s32.totalorder %s27, 0
        %s527 = scalar_select %p526, 1, 0
        %v528 = vstv %s527
        %vm529 = vcmp.eq.s32.totalorder %v528, 1
        %v530 = vsel %vm529, 0.0, %v525
        %vm531 = vcmask 516096
        %532 = vst.msk [vmem:[#allocation2] sm:$0x1] %vm531, 0.0
        %533 = vst.msk [vmem:[#allocation2 + $0x10] sm:$0x1] %vm531, 0.0
        %534 = vst.msk [vmem:[#allocation2 + $0x20] sm:$0x1] %vm531, 0.0
        %535 = vst.msk [vmem:[#allocation2 + $0x30] sm:$0x1] %vm531, 0.0
        %536 = vst.msk [vmem:[#allocation2 + $0x40] sm:$0x1] %vm531, 0.0
        %vm537 = vcmask 523264
        %538 = vst.msk [vmem:[#allocation2 + $0x1] sm:$0xff] %vm537, %v530
        %s539 = scalar_lea.vmem [#allocation2], 16
        %540 = vst.msk [vmem:[%s539 + $0x1] sm:$0xff] %vm537, %v483
        %541 = vst.msk [vmem:[%s539 + $0x11] sm:$0xff] %vm537, %v484
        %542 = vst.msk [vmem:[%s539 + $0x21] sm:$0xff] %vm537, %v485
        %543 = vst.msk [vmem:[%s539 + $0x31] sm:$0xff] %vm537, %v486
        %v544 = vld [vmem:[#allocation2] ss:$2 sm:$0xf]
        %s545 = scalar_lea.vmem [#allocation2], 16
        %v546 = vld [vmem:[%s545] ss:$2 sm:$0xf]
        %s547 = scalar_lea.vmem [#allocation2], 32
        %v548 = vld [vmem:[%s547] ss:$2 sm:$0xf]
        %s549 = scalar_lea.vmem [#allocation2], 48
        %v550 = vld [vmem:[%s549] ss:$2 sm:$0xf]
        %s551 = scalar_lea.vmem [#allocation2], 64
        %v552 = vld [vmem:[%s551] ss:$2 sm:$0xf]
        %s553 = scalar_lea.vmem [#allocation2], 1
        %v554 = vld [vmem:[%s553] ss:$2 sm:$0xf]
        %s555 = scalar_lea.vmem [#allocation2], 17
        %v556 = vld [vmem:[%s555] ss:$2 sm:$0xf]
        %s557 = scalar_lea.vmem [#allocation2], 33
        %v558 = vld [vmem:[%s557] ss:$2 sm:$0xf]
        %s559 = scalar_lea.vmem [#allocation2], 49
        %v560 = vld [vmem:[%s559] ss:$2 sm:$0xf]
        %s561 = scalar_lea.vmem [#allocation2], 65
        %v562 = vld [vmem:[%s561] ss:$2 sm:$0xf]
        %s563 = scalar_lea.vmem [#allocation2], 2
        %v564 = vld [vmem:[%s563] ss:$2 sm:$0xf]
        %s565 = scalar_lea.vmem [#allocation2], 18
        %v566 = vld [vmem:[%s565] ss:$2 sm:$0xf]
        %s567 = scalar_lea.vmem [#allocation2], 34
        %v568 = vld [vmem:[%s567] ss:$2 sm:$0xf]
        %s569 = scalar_lea.vmem [#allocation2], 50
        %v570 = vld [vmem:[%s569] ss:$2 sm:$0xf]
        %s571 = scalar_lea.vmem [#allocation2], 66
        %v572 = vld [vmem:[%s571] ss:$2 sm:$0xf]
        %v573 = vmax.f32 %v544, %v554
        %v574 = vmax.f32 %v546, %v556
        %v575 = vmax.f32 %v548, %v558
        %v576 = vmax.f32 %v550, %v560
        %v577 = vmax.f32 %v552, %v562
        %v578 = vmax.f32 %v573, %v564
        %v579 = vmax.f32 %v574, %v566
        %v580 = vmax.f32 %v575, %v568
        %v581 = vmax.f32 %v576, %v570
        %v582 = vmax.f32 %v577, %v572
        %v583 = vmax.f32 %v578, %v579
        %v584 = vmax.f32 %v580, %v581
        %v585 = vmax.f32 %v583, %v580
        %v586 = vmax.f32 %v584, %v582
        %vm587 = vcmask 519168
        %588 = vst.msk [vmem:[%s300] sm:$0xf] %vm587, %v585
        %589 = vst.msk [vmem:[%s300 + $0x4] sm:$0xf] %vm587, %v586
        %s590 = sand.u32 %s171, 1
        %s591 = scalar_lea.sflag [#allocation5], %s590
        %s592 = sand.u32 %s171, 1
        %s593 = smul.addr %s592, 8
        %s594 = scalar_lea.vmem [#allocation6], %s593
        // Predicated region
        $region45: #{tpu_custom_call.1} parent=39 // pred_check
          %p595 = pneg %p181
        $region46: #{tpu_custom_call.1} parent=39 // pred_check_branch
          %597 = sbr.rel (%p595) target = $region48
        $region47: #{tpu_custom_call.1} parent=39 // pred_region
          %599 = vsyncadd %s591, 0
          %s600 = smul.addr %s27, 2
          %s601 = smul.addr %s26, 4
          %s602 = sadd.s32 %s600, %s601
          %s603 = smul.addr %s602, 4
          %s604 = scalar_lea.hbm %s5, %s603
          %s605 = sshll.u32 %s594, 4
          %s606 = int_to_ptr.vmem [resolvable:$true] %s605
          %s607 = sshll.u32 %s604, 4
          %s608 = int_to_ptr.hbm [resolvable:$true] %s607
          %613 = dma.vmem_to_hbm [thread:$0]  %s606, 128, %s608, %s591, 64, 64, 4
        $region48: #{tpu_custom_call.1} parent=39 // pred_fallthru
          _
      $region40: #{tpu_custom_call.1} parent=5 // pred_fallthru
        _
      %p614 = scmp.le.s32.totalorder 2, %s17
      // Predicated region
      $region49: #{tpu_custom_call.1} parent=5 // pred_check
        %p615 = pneg %p614
      $region50: #{tpu_custom_call.1} parent=5 // pred_check_branch
        %617 = sbr.rel (%p615) target = $region52
      $region51: #{tpu_custom_call.1} parent=5 // pred_region
        %s618 = ssub.s32 %s17, 2
        // Predicated region
        $region53: #{tpu_custom_call.1} parent=51 // pred_check
          %p619 = pneg %p187
        $region54: #{tpu_custom_call.1} parent=51 // pred_check_branch
          %621 = sbr.rel (%p619) target = $region56
        $region55: #{tpu_custom_call.1} parent=51 // pred_region
          %s622 = sand.u32 %s172, 1
          %s623 = scalar_lea.sflag [#allocation5], %s622
          %s624 = sand.u32 %s172, 1
          %s625 = smul.addr %s624, 8
          %s626 = scalar_lea.vmem [#allocation6], %s625
          %628 = dma.done %s623, 128
        $region56: #{tpu_custom_call.1} parent=51 // pred_fallthru
          _
      $region52: #{tpu_custom_call.1} parent=5 // pred_fallthru
        _
    $region6: #{tpu_custom_call.1} parent=1 // loop_footer
      %s21 = sadd.s32 1, %s17
    $region7: #{tpu_custom_call.1} parent=1 // loop_footer_branch
      %16 = sbr.rel target = $region3
    $region8: #{tpu_custom_call.1} parent=1 // loop_exit
      _
    %629 = vsyncpa [#allocation4], 1
    %s630 = scalar_lea.sflag [#allocation4], 1
    %631 = vsyncpa %s630, 1
    %632 = vsyncpa [#allocation5], 1
    %s633 = scalar_lea.sflag [#allocation5], 1
    %634 = vsyncpa %s633, 1

</llo_original>
